<compile_context>
chip_gen: v7x
topology: tpu7x:2x2x1
jax: 0.10.0
libtpu: 0.0.40
codegen_flags: <defaults>
</compile_context>

<pallas_src>
import functools

import jax
import jax.numpy as jnp
from jax.experimental import pallas as pl
from jax.experimental.pallas import tpu as pltpu


# ---------------------------------------------------------------------------
# Pass 1: activation y = x * mish(softplus(x)) + running global min/max
# ---------------------------------------------------------------------------
def _mish_stats_kernel(x_ref, y_ref, mn_ref, mx_ref, *, total, tm, lanes,
                       has_pad):
    i = pl.program_id(0)
    x = x_ref[...].astype(jnp.float32)

    # numerically stable softplus(x) = max(x, 0) + log1p(exp(-|x|))
    sp = jnp.maximum(x, 0.0) + jnp.log1p(jnp.exp(-jnp.abs(x)))
    # tanh(softplus(sp)) == (1 + 2t) / (1 + 2t + 2t^2) with t = exp(-sp) <= 1
    t = jnp.exp(-sp)
    num = 1.0 + 2.0 * t
    y = x * sp * (num / (num + 2.0 * t * t))

    y_ref[...] = y.astype(y_ref.dtype)

    if has_pad:
        # exclude the padded tail (of the last tile) from the global min/max;
        # the pad value itself is irrelevant.
        row = jax.lax.broadcasted_iota(jnp.int32, (tm, lanes), 0)
        col = jax.lax.broadcasted_iota(jnp.int32, (tm, lanes), 1)
        flat_idx = (i * tm + row) * lanes + col
        valid = flat_idx < total
        y_min_src = jnp.where(valid, y, jnp.inf)
        y_max_src = jnp.where(valid, y, -jnp.inf)
    else:
        y_min_src = y
        y_max_src = y

    tile_min = jnp.min(y_min_src)
    tile_max = jnp.max(y_max_src)

    # P3 accumulator pattern: the (8, 128) stats blocks stay VMEM-resident
    # across the whole ("arbitrary") grid axis.
    @pl.when(i == 0)
    def _():
        mn_ref[...] = jnp.full((8, 128), jnp.inf, dtype=jnp.float32)
        mx_ref[...] = jnp.full((8, 128), -jnp.inf, dtype=jnp.float32)

    mn_ref[...] = jnp.minimum(mn_ref[...], tile_min)
    mx_ref[...] = jnp.maximum(mx_ref[...], tile_max)


# ---------------------------------------------------------------------------
# Pass 2: fake-quantize with global scale / zero_point
# ---------------------------------------------------------------------------
def _quantize_kernel(y_ref, mn_ref, mx_ref, o_ref, *, qmax):
    min_val = jnp.min(mn_ref[...])
    max_val = jnp.max(mx_ref[...])
    span = max_val - min_val
    # scalar math, once per tile (this pass only runs when span > 0)
    scale = jnp.where(span > 0.0, span / qmax, jnp.float32(1.0))
    zero_point = 0.0 - jnp.round(min_val / scale)     # qmin == 0
    inv_scale = 1.0 / scale                           # hoisted: no per-elem divide

    y = y_ref[...]
    q = jnp.clip(jnp.round(y * inv_scale + zero_point), 0.0, qmax)
    o_ref[...] = ((q - zero_point) * scale).astype(o_ref.dtype)


# ---------------------------------------------------------------------------
# layout helpers (all static Python)
# ---------------------------------------------------------------------------
def _choose_lanes(total):
    # widest lane-dense layout (multiple of 128) that tiles the tensor into
    # whole (8, lanes) rows -> unmasked full-width stores, large DMAs
    for cand in (4096, 2048, 1024, 512, 256, 128):
        if total % (8 * cand) == 0:
            return cand
    return 512   # ragged: pad < one (8, lanes) slab, masked in-kernel


def _pick_tile_rows(rows_padded, lanes):
    # keep each pipelined buffer <= ~1 MiB f32 (safe on v5e/v6e/v7x defaults)
    max_tm = max(8, min(512, (1 << 20) // (lanes * 4)))
    for cand in range(max_tm, 7, -8):
        if rows_padded % cand == 0:
            return cand
    return 8


# ---------------------------------------------------------------------------
# wrapper
# ---------------------------------------------------------------------------
@functools.partial(jax.jit, static_argnames=("num_bits",))
def quantized_mish(x, num_bits=8):
    """Pallas-TPU forward of QuantizedMish on an NCHW float tensor."""
    orig_shape = x.shape
    orig_dtype = x.dtype
    total = int(x.size)
    qmax = float(2 ** num_bits - 1)

    lanes = _choose_lanes(total)
    rows = -(-total // lanes)
    rows_padded = -(-rows // 8) * 8
    padded_total = rows_padded * lanes
    has_pad = padded_total != total

    flat = x.reshape(-1).astype(jnp.float32)
    if has_pad:
        flat = jnp.pad(flat, (0, padded_total - total))   # small tail only
    x2d = flat.reshape(rows_padded, lanes)

    tm = _pick_tile_rows(rows_padded, lanes)
    n_tiles = rows_padded // tm

    # ---- pass 1: activation + global min/max stats ----
    y2d, mn_part, mx_part = pl.pallas_call(
        functools.partial(_mish_stats_kernel, total=total, tm=tm,
                          lanes=lanes, has_pad=has_pad),
        out_shape=(
            jax.ShapeDtypeStruct((rows_padded, lanes), jnp.float32),  # y
            jax.ShapeDtypeStruct((8, 128), jnp.float32),              # min acc
            jax.ShapeDtypeStruct((8, 128), jnp.float32),              # max acc
        ),
        grid_spec=pltpu.PrefetchScalarGridSpec(
            num_scalar_prefetch=0,
            grid=(n_tiles,),
            in_specs=[pl.BlockSpec((tm, lanes), lambda i: (i, 0))],
            out_specs=[
                pl.BlockSpec((tm, lanes), lambda i: (i, 0)),
                pl.BlockSpec((8, 128), lambda i: (0, 0)),
                pl.BlockSpec((8, 128), lambda i: (0, 0)),
            ],
        ),
        compiler_params=pltpu.CompilerParams(
            dimension_semantics=("arbitrary",)),   # min/max accumulates
    )(x2d)

    min_val = jnp.min(mn_part)
    max_val = jnp.max(mx_part)
    degenerate = min_val == max_val

    # ---- pass 2: tiled fake-quantize (skipped entirely when min == max) ----
    def _do_quantize(y, mn, mx):
        return pl.pallas_call(
            functools.partial(_quantize_kernel, qmax=qmax),
            out_shape=jax.ShapeDtypeStruct((rows_padded, lanes), jnp.float32),
            grid_spec=pltpu.PrefetchScalarGridSpec(
                num_scalar_prefetch=0,
                grid=(n_tiles,),
                in_specs=[
                    pl.BlockSpec((tm, lanes), lambda i: (i, 0)),
                    pl.BlockSpec((8, 128), lambda i: (0, 0)),
                    pl.BlockSpec((8, 128), lambda i: (0, 0)),
                ],
                out_specs=pl.BlockSpec((tm, lanes), lambda i: (i, 0)),
            ),
            compiler_params=pltpu.CompilerParams(
                dimension_semantics=("parallel",)),   # elementwise; megacore
        )(y, mn, mx)

    out2d = jax.lax.cond(degenerate,
                         lambda y, mn, mx: y,          # PyTorch: return x as-is
                         _do_quantize,
                         y2d, mn_part, mx_part)

    out = out2d.reshape(-1)
    if has_pad:
        out = out[:total]
    return out.reshape(orig_shape).astype(orig_dtype)


# ---------------------------------------------------------------------------
# pure-JAX reference (mirrors the PyTorch forward exactly: tanh + division)
# ---------------------------------------------------------------------------
def _reference(x, num_bits=8):
    x = x.astype(jnp.float32)

    def softplus(v):
        return jnp.maximum(v, 0.0) + jnp.log1p(jnp.exp(-jnp.abs(v)))

    sp = softplus(x)
    y = x * (sp * jnp.tanh(softplus(sp)))
    qmin, qmax = 0.0, float(2 ** num_bits - 1)
    mn, mx = jnp.min(y), jnp.max(y)
    scale = (mx - mn) / (qmax - qmin)
    zp = qmin - jnp.round(mn / scale)
    yq = jnp.clip(jnp.round(y / scale + zp), qmin, qmax)
    yd = (yq - zp) * scale
    out = jnp.where(mn == mx, y, yd)
    step = jnp.where(mn == mx, jnp.float32(1.0), scale)
    return out, step


def _check_against_reference(x, num_bits=8):
    out = jax.block_until_ready(quantized_mish(x, num_bits=num_bits))
    ref, step = _reference(x, num_bits=num_bits)
    assert out.shape == x.shape and out.dtype == x.dtype
    diff = jnp.abs(out.astype(jnp.float32) - ref)
    step_f = float(step)
    near_tol = max(1e-4, 1e-2 * step_f)
    # fake-quant snaps values to a grid of spacing `step`; FP noise at a
    # rounding boundary may legally move an element by one step, so require
    # near-exact agreement almost everywhere and never more than one step.
    assert float(jnp.max(diff)) <= step_f * 1.01 + 1e-4, \
        "kernel deviates from reference by more than one quantization step"
    assert float(jnp.mean((diff <= near_tol).astype(jnp.float32))) >= 0.99, \
        "too many quantization-boundary mismatches vs reference"
    return out


if __name__ == "__main__":
    key = jax.random.PRNGKey(0)

    # primary case: small NCHW activation (batch=2, channels=4, 16x16 spatial)
    x = jax.random.normal(key, (2, 4, 16, 16), dtype=jnp.float32) * 2.0
    _check_against_reference(x, num_bits=8)

    # multi-tile case: exercises the min/max accumulator across grid steps
    key2 = jax.random.fold_in(key, 1)
    x_big = jax.random.normal(key2, (8, 16, 64, 64), dtype=jnp.float32) * 1.5
    _check_against_reference(x_big, num_bits=8)

    # degenerate (min == max) path + ragged/masked layout: constant zeros must
    # pass through unquantized (y(0) == 0), exactly like the PyTorch module.
    x0 = jnp.zeros((1, 4, 8, 8), dtype=jnp.float32)
    out0 = jax.block_until_ready(quantized_mish(x0, num_bits=8))
    assert out0.shape == x0.shape and out0.dtype == x0.dtype
    assert jnp.allclose(out0, 0.0, atol=1e-6)

    print("KERNEL_OK")
</pallas_src>

<mosaic_0001>
module attributes {stable_mosaic.version = 11 : i64} {
  func.func @_mish_stats_kernel(%arg0: i32, %arg1: memref<8x256xf32, #tpu.memory_space<vmem>>, %arg2: memref<8x256xf32, #tpu.memory_space<vmem>>, %arg3: memref<8x128xf32, #tpu.memory_space<vmem>>, %arg4: memref<8x128xf32, #tpu.memory_space<vmem>>) attributes {dimension_semantics = [#tpu.dimension_semantics<arbitrary>], iteration_bounds = array<i64: 1>, scalar_prefetch = 0 : i64, scratch_operands = 0 : i64, tpu.core_type = #tpu.core_type<tc>, window_params = [{transform_indices = @transform_0, window_bounds = array<i64: 8, 256>}, {transform_indices = @transform_1, window_bounds = array<i64: 8, 256>}, {pipeline_mode = #tpu.pipeline_mode<synchronous>, transform_indices = @transform_2, window_bounds = array<i64: 8, 128>}, {pipeline_mode = #tpu.pipeline_mode<synchronous>, transform_indices = @transform_3, window_bounds = array<i64: 8, 128>}]} {
    %c0 = arith.constant 0 : index
    %c0_0 = arith.constant 0 : index
    %0 = vector.load %arg1[%c0, %c0_0] : memref<8x256xf32, #tpu.memory_space<vmem>>, vector<8x256xf32>
    %cst = arith.constant 0.000000e+00 : f32
    %1 = vector.broadcast %cst : f32 to vector<8x256xf32>
    %2 = arith.maximumf %0, %1 : vector<8x256xf32>
    %3 = math.absf %0 : vector<8x256xf32>
    %cst_1 = arith.constant 0.000000e+00 : f32
    %4 = vector.broadcast %cst_1 : f32 to vector<8x256xf32>
    %5 = arith.subf %4, %3 : vector<8x256xf32>
    %6 = math.exp %5 : vector<8x256xf32>
    %7 = math.log1p %6 : vector<8x256xf32>
    %8 = arith.addf %2, %7 : vector<8x256xf32>
    %cst_2 = arith.constant 0.000000e+00 : f32
    %9 = vector.broadcast %cst_2 : f32 to vector<8x256xf32>
    %10 = arith.subf %9, %8 : vector<8x256xf32>
    %11 = math.exp %10 : vector<8x256xf32>
    %cst_3 = arith.constant 2.000000e+00 : f32
    %12 = vector.broadcast %cst_3 : f32 to vector<8x256xf32>
    %13 = arith.mulf %12, %11 : vector<8x256xf32>
    %cst_4 = arith.constant 1.000000e+00 : f32
    %14 = vector.broadcast %cst_4 : f32 to vector<8x256xf32>
    %15 = arith.addf %14, %13 : vector<8x256xf32>
    %16 = arith.mulf %0, %8 : vector<8x256xf32>
    %cst_5 = arith.constant 2.000000e+00 : f32
    %17 = vector.broadcast %cst_5 : f32 to vector<8x256xf32>
    %18 = arith.mulf %17, %11 : vector<8x256xf32>
    %19 = arith.mulf %18, %11 : vector<8x256xf32>
    %20 = arith.addf %15, %19 : vector<8x256xf32>
    %21 = arith.divf %15, %20 : vector<8x256xf32>
    %22 = arith.mulf %16, %21 : vector<8x256xf32>
    %c0_6 = arith.constant 0 : index
    %c0_7 = arith.constant 0 : index
    %23 = vector.load %arg2[%c0_6, %c0_7] : memref<8x256xf32, #tpu.memory_space<vmem>>, vector<8x256xf32>
    tpu.vector_store %arg2[%c0_6, %c0_7], %22 {strides = array<i32>} : memref<8x256xf32, #tpu.memory_space<vmem>>, vector<8x256xf32>,
    %24 = vector.shape_cast %22 : vector<8x256xf32> to vector<1x8x256xf32>
    %cst_8 = arith.constant dense<0x7F800000> : vector<1xf32>
    %25 = vector.multi_reduction <minimumf>, %24, %cst_8 [1, 2] : vector<1x8x256xf32> to vector<1xf32>
    %26 = vector.shape_cast %25 : vector<1xf32> to vector<1x1x1xf32>
    %27 = vector.extract %26[0, 0, 0] : f32 from vector<1x1x1xf32>
    %28 = vector.shape_cast %22 : vector<8x256xf32> to vector<1x8x256xf32>
    %cst_9 = arith.constant dense<0xFF800000> : vector<1xf32>
    %29 = vector.multi_reduction <maximumf>, %28, %cst_9 [1, 2] : vector<1x8x256xf32> to vector<1xf32>
    %30 = vector.shape_cast %29 : vector<1xf32> to vector<1x1x1xf32>
    %31 = vector.extract %30[0, 0, 0] : f32 from vector<1x1x1xf32>
    %c0_i32 = arith.constant 0 : i32
    %32 = arith.cmpi eq, %arg0, %c0_i32 : i32
    %33 = arith.extui %32 : i1 to i32
    %c0_i32_10 = arith.constant 0 : i32
    %34 = arith.cmpi ne, %33, %c0_i32_10 : i32
    scf.if %34 {
      %cst_19 = arith.constant 0x7F800000 : f32
      %43 = vector.broadcast %cst_19 : f32 to vector<8x128xf32>
      %c0_20 = arith.constant 0 : index
      %c0_21 = arith.constant 0 : index
      %44 = vector.load %arg3[%c0_20, %c0_21] : memref<8x128xf32, #tpu.memory_space<vmem>>, vector<8x128xf32>
      tpu.vector_store %arg3[%c0_20, %c0_21], %43 {strides = array<i32>} : memref<8x128xf32, #tpu.memory_space<vmem>>, vector<8x128xf32>,
      %cst_22 = arith.constant 0xFF800000 : f32
      %45 = vector.broadcast %cst_22 : f32 to vector<8x128xf32>
      %c0_23 = arith.constant 0 : index
      %c0_24 = arith.constant 0 : index
      %46 = vector.load %arg4[%c0_23, %c0_24] : memref<8x128xf32, #tpu.memory_space<vmem>>, vector<8x128xf32>
      tpu.vector_store %arg4[%c0_23, %c0_24], %45 {strides = array<i32>} : memref<8x128xf32, #tpu.memory_space<vmem>>, vector<8x128xf32>,
    } else {
    }
    %c0_11 = arith.constant 0 : index
    %c0_12 = arith.constant 0 : index
    %35 = vector.load %arg3[%c0_11, %c0_12] : memref<8x128xf32, #tpu.memory_space<vmem>>, vector<8x128xf32>
    %36 = vector.broadcast %27 : f32 to vector<8x128xf32>
    %37 = arith.minimumf %35, %36 : vector<8x128xf32>
    %c0_13 = arith.constant 0 : index
    %c0_14 = arith.constant 0 : index
    %38 = vector.load %arg3[%c0_13, %c0_14] : memref<8x128xf32, #tpu.memory_space<vmem>>, vector<8x128xf32>
    tpu.vector_store %arg3[%c0_13, %c0_14], %37 {strides = array<i32>} : memref<8x128xf32, #tpu.memory_space<vmem>>, vector<8x128xf32>,
    %c0_15 = arith.constant 0 : index
    %c0_16 = arith.constant 0 : index
    %39 = vector.load %arg4[%c0_15, %c0_16] : memref<8x128xf32, #tpu.memory_space<vmem>>, vector<8x128xf32>
    %40 = vector.broadcast %31 : f32 to vector<8x128xf32>
    %41 = arith.maximumf %39, %40 : vector<8x128xf32>
    %c0_17 = arith.constant 0 : index
    %c0_18 = arith.constant 0 : index
    %42 = vector.load %arg4[%c0_17, %c0_18] : memref<8x128xf32, #tpu.memory_space<vmem>>, vector<8x128xf32>
    tpu.vector_store %arg4[%c0_17, %c0_18], %41 {strides = array<i32>} : memref<8x128xf32, #tpu.memory_space<vmem>>, vector<8x128xf32>,
    return
  }
  func.func @transform_0(%arg0: i32) -> (i32, i32) {
    %c0_i32 = arith.constant 0 : i32
    %c0_i32_0 = arith.constant 0 : i32
    return %arg0, %c0_i32 : i32, i32
  }
  func.func @transform_1(%arg0: i32) -> (i32, i32) {
    %c0_i32 = arith.constant 0 : i32
    %c0_i32_0 = arith.constant 0 : i32
    return %arg0, %c0_i32 : i32, i32
  }
  func.func @transform_2(%arg0: i32) -> (i32, i32) {
    %c0_i32 = arith.constant 0 : i32
    %c0_i32_0 = arith.constant 0 : i32
    %c0_i32_1 = arith.constant 0 : i32
    return %c0_i32, %c0_i32_0 : i32, i32
  }
  func.func @transform_3(%arg0: i32) -> (i32, i32) {
    %c0_i32 = arith.constant 0 : i32
    %c0_i32_0 = arith.constant 0 : i32
    %c0_i32_1 = arith.constant 0 : i32
    return %c0_i32, %c0_i32_0 : i32, i32
  }
}

module attributes {stable_mosaic.version = 11 : i64} {
  func.func @_quantize_kernel(%arg0: i32, %arg1: memref<8x256xf32, #tpu.memory_space<vmem>>, %arg2: memref<8x128xf32, #tpu.memory_space<vmem>>, %arg3: memref<8x128xf32, #tpu.memory_space<vmem>>, %arg4: memref<8x256xf32, #tpu.memory_space<vmem>>) attributes {dimension_semantics = [#tpu.dimension_semantics<parallel>], iteration_bounds = array<i64: 1>, scalar_prefetch = 0 : i64, scratch_operands = 0 : i64, tpu.core_type = #tpu.core_type<tc>, window_params = [{transform_indices = @transform_0, window_bounds = array<i64: 8, 256>}, {pipeline_mode = #tpu.pipeline_mode<synchronous>, transform_indices = @transform_1, window_bounds = array<i64: 8, 128>}, {pipeline_mode = #tpu.pipeline_mode<synchronous>, transform_indices = @transform_2, window_bounds = array<i64: 8, 128>}, {transform_indices = @transform_3, window_bounds = array<i64: 8, 256>}]} {
    %c0 = arith.constant 0 : index
    %c0_0 = arith.constant 0 : index
    %0 = vector.load %arg2[%c0, %c0_0] : memref<8x128xf32, #tpu.memory_space<vmem>>, vector<8x128xf32>
    %1 = vector.shape_cast %0 : vector<8x128xf32> to vector<1x8x128xf32>
    %cst = arith.constant dense<0x7F800000> : vector<1xf32>
    %2 = vector.multi_reduction <minimumf>, %1, %cst [1, 2] : vector<1x8x128xf32> to vector<1xf32>
    %3 = vector.shape_cast %2 : vector<1xf32> to vector<1x1x1xf32>
    %4 = vector.extract %3[0, 0, 0] : f32 from vector<1x1x1xf32>
    %c0_1 = arith.constant 0 : index
    %c0_2 = arith.constant 0 : index
    %5 = vector.load %arg3[%c0_1, %c0_2] : memref<8x128xf32, #tpu.memory_space<vmem>>, vector<8x128xf32>
    %6 = vector.shape_cast %5 : vector<8x128xf32> to vector<1x8x128xf32>
    %cst_3 = arith.constant dense<0xFF800000> : vector<1xf32>
    %7 = vector.multi_reduction <maximumf>, %6, %cst_3 [1, 2] : vector<1x8x128xf32> to vector<1xf32>
    %8 = vector.shape_cast %7 : vector<1xf32> to vector<1x1x1xf32>
    %9 = vector.extract %8[0, 0, 0] : f32 from vector<1x1x1xf32>
    %10 = arith.subf %9, %4 : f32
    %cst_4 = arith.constant 0.000000e+00 : f32
    %11 = arith.cmpf ogt, %10, %cst_4 : f32
    %cst_5 = arith.constant 2.550000e+02 : f32
    %12 = arith.divf %10, %cst_5 : f32
    %cst_6 = arith.constant 1.000000e+00 : f32
    %13 = arith.select %11, %12, %cst_6 : f32
    %14 = arith.divf %4, %13 : f32
    %15 = math.roundeven %14 : f32
    %cst_7 = arith.constant 0.000000e+00 : f32
    %16 = arith.subf %cst_7, %15 : f32
    %cst_8 = arith.constant 1.000000e+00 : f32
    %17 = arith.divf %cst_8, %13 : f32
    %c0_9 = arith.constant 0 : index
    %c0_10 = arith.constant 0 : index
    %18 = vector.load %arg1[%c0_9, %c0_10] : memref<8x256xf32, #tpu.memory_space<vmem>>, vector<8x256xf32>
    %19 = vector.broadcast %17 : f32 to vector<8x256xf32>
    %20 = arith.mulf %18, %19 : vector<8x256xf32>
    %21 = vector.broadcast %16 : f32 to vector<8x256xf32>
    %22 = arith.addf %20, %21 : vector<8x256xf32>
    %23 = math.roundeven %22 : vector<8x256xf32>
    %cst_11 = arith.constant 0.000000e+00 : f32
    %cst_12 = arith.constant 2.550000e+02 : f32
    %24 = vector.broadcast %cst_11 : f32 to vector<8x256xf32>
    %25 = arith.maximumf %24, %23 : vector<8x256xf32>
    %26 = vector.broadcast %cst_12 : f32 to vector<8x256xf32>
    %27 = arith.minimumf %26, %25 : vector<8x256xf32>
    %28 = vector.broadcast %16 : f32 to vector<8x256xf32>
    %29 = arith.subf %27, %28 : vector<8x256xf32>
    %30 = vector.broadcast %13 : f32 to vector<8x256xf32>
    %31 = arith.mulf %29, %30 : vector<8x256xf32>
    %c0_13 = arith.constant 0 : index
    %c0_14 = arith.constant 0 : index
    %32 = vector.load %arg4[%c0_13, %c0_14] : memref<8x256xf32, #tpu.memory_space<vmem>>, vector<8x256xf32>
    tpu.vector_store %arg4[%c0_13, %c0_14], %31 {strides = array<i32>} : memref<8x256xf32, #tpu.memory_space<vmem>>, vector<8x256xf32>,
    return
  }
  func.func @transform_0(%arg0: i32) -> (i32, i32) {
    %c0_i32 = arith.constant 0 : i32
    %c0_i32_0 = arith.constant 0 : i32
    return %arg0, %c0_i32 : i32, i32
  }
  func.func @transform_1(%arg0: i32) -> (i32, i32) {
    %c0_i32 = arith.constant 0 : i32
    %c0_i32_0 = arith.constant 0 : i32
    %c0_i32_1 = arith.constant 0 : i32
    return %c0_i32, %c0_i32_0 : i32, i32
  }
  func.func @transform_2(%arg0: i32) -> (i32, i32) {
    %c0_i32 = arith.constant 0 : i32
    %c0_i32_0 = arith.constant 0 : i32
    %c0_i32_1 = arith.constant 0 : i32
    return %c0_i32, %c0_i32_0 : i32, i32
  }
  func.func @transform_3(%arg0: i32) -> (i32, i32) {
    %c0_i32 = arith.constant 0 : i32
    %c0_i32_0 = arith.constant 0 : i32
    return %arg0, %c0_i32 : i32, i32
  }
}

</mosaic_0001>

<llo_original>
// kernel: quantized_mish.1
$region0: #{quantized_mish.1}
  #allocation0 [shape = 'u32[]', space=smem, size = 0x4, offset = 0x4, fixed_abs, tag = 'smem constant byte address 0x4 - core index']
  #allocation1 [shape = 'u32[144,128]{1,0:T(1,128)}', space=vmem, size = 0x12000, scoped, tag = 'internal scratch']
  %s0 = inlined_call_operand.vmem [shape: f32[8,256], index: 0, kind: input, shape index: {}]
  %s1 = inlined_call_operand.vmem [shape: f32[8,256], index: 1, kind: output, shape index: {0}]
  %s2 = inlined_call_operand.vmem [shape: f32[8,128], index: 2, kind: output, shape index: {1}]
  %s3 = inlined_call_operand.vmem [shape: f32[8,128], index: 3, kind: output, shape index: {2}]
  %4 = xla_tuple %s1, %s2, %s3
  %s5 = sld [smem:[#allocation0]]
  $region34: #{quantized_mish.1} parent=0
    _
  %s7 = ssub.s32 1, %s5
  %s8 = scalar_select 0, %s7, %s5
  // Predicated region
  $region2: #{quantized_mish.1} parent=0 // pred_check
    _
  $region3: #{quantized_mish.1} parent=0 // pred_check_branch
    %10 = sbr.rel (0) target = $region5
  $region4: #{quantized_mish.1} parent=0 // pred_region
    _
  $region5: #{quantized_mish.1} parent=0 // pred_fallthru
    _
  %v11 = vld [vmem:[%s0] sm:$0xff]
  %v12 = vld [vmem:[%s0 + $0x8] sm:$0xff]
  %v13 = vmax.f32 %v11, 0.0
  %v14 = vmax.f32 %v12, 0.0
  %v15 = vand.u32 2147483647, %v11
  %v16 = vand.u32 2147483647, %v12
  %v17 = vsub.f32 0.0, %v15
  %v18 = vsub.f32 0.0, %v16
  %v19 = vmul.f32 %v17, 1.442695
  %v20 = vpow.pop %v19
  %v21 = vmul.f32 %v18, 1.442695
  %v22 = vpow.pop %v21
  %v23 = vadd.f32 %v20, 1.0
  %v24 = vlog2.pop %v23
  %v25 = vmul.f32 %v24, 0.6931472
  %v26 = vmul.f32 -0.5, %v20
  %v27 = vadd.f32 %v26, 1.0
  %v28 = vmul.f32 %v27, %v20
  %v29 = vand.u32 2147483647, %v20
  %vm30 = vcmp.lt.f32.partialorder %v29, 0.0004427343
  %v31 = vsel %vm30, %v28, %v25
  %v32 = vadd.f32 %v22, 1.0
  %v33 = vlog2.pop %v32
  %v34 = vmul.f32 %v33, 0.6931472
  %v35 = vmul.f32 -0.5, %v22
  %v36 = vadd.f32 %v35, 1.0
  %v37 = vmul.f32 %v36, %v22
  %v38 = vand.u32 2147483647, %v22
  %vm39 = vcmp.lt.f32.partialorder %v38, 0.0004427343
  %v40 = vsel %vm39, %v37, %v34
  %v41 = vadd.f32 %v13, %v31
  %v42 = vadd.f32 %v14, %v40
  %v43 = vsub.f32 0.0, %v41
  %v44 = vsub.f32 0.0, %v42
  %v45 = vmul.f32 %v43, 1.442695
  %v46 = vpow.pop %v45
  %v47 = vmul.f32 %v44, 1.442695
  %v48 = vpow.pop %v47
  %v49 = vmul.f32 %v46, 2.0
  %v50 = vmul.f32 %v48, 2.0
  %v51 = vadd.f32 %v49, 1.0
  %v52 = vadd.f32 %v50, 1.0
  %v53 = vmul.f32 %v11, %v41
  %v54 = vmul.f32 %v12, %v42
  %v55 = vmul.f32 %v49, %v46
  %v56 = vmul.f32 %v50, %v48
  %v57 = vadd.f32 %v51, %v55
  %v58 = vadd.f32 %v52, %v56
  %v59 = vrcp.pop %v57
  %v60 = vmul.f32 %v51, %v59
  %v61 = vrcp.pop %v58
  %v62 = vmul.f32 %v52, %v61
  %v63 = vmul.f32 %v53, %v60
  %v64 = vmul.f32 %v54, %v62
  %65 = vst [vmem:[%s1] sm:$0xff] %v63
  %66 = vst [vmem:[%s1 + $0x8] sm:$0xff] %v64
  %v67 = vmin.f32 %v63, %v64
  %68 = vmin.xlane.f32.xlu0 %v67
  %v69 = vpop.xlane.xlu0 %68
  %v70 = vrot.slane %v69, 4
  %v71 = vmin.f32 %v69, %v70
  %v72 = vrot.slane %v71, 2
  %v73 = vmin.f32 %v71, %v72
  %v74 = vrot.slane %v73, 1
  %v75 = vmin.f32 %v73, %v74
  %s76 = vtos %v75
  %v77 = vmax.f32 %v63, %v64
  %78 = vmax.xlane.f32.xlu0 %v77
  %v79 = vpop.xlane.xlu0 %78
  %v80 = vrot.slane %v79, 4
  %v81 = vmax.f32 %v79, %v80
  %v82 = vrot.slane %v81, 2
  %v83 = vmax.f32 %v81, %v82
  %v84 = vrot.slane %v83, 1
  %v85 = vmax.f32 %v83, %v84
  %s86 = vtos %v85
  %p87 = scmp.eq.s32.totalorder 0, 0
  // Predicated region
  $region6: #{quantized_mish.1} parent=0 // pred_check
    %p88 = pneg %p87
  $region7: #{quantized_mish.1} parent=0 // pred_check_branch
    %90 = sbr.rel (%p88) target = $region9
  $region8: #{quantized_mish.1} parent=0 // pred_region
    %91 = vst [vmem:[%s2] sm:$0xff] inf
    %92 = vst [vmem:[%s3] sm:$0xff] -inf
  $region9: #{quantized_mish.1} parent=0 // pred_fallthru
    _
  %v93 = vld [vmem:[%s2] sm:$0xff]
  %v94 = vstv %s76
  %v95 = vmin.f32 %v93, %v94
  %96 = vst [vmem:[%s2] sm:$0xff] %v95
  %v97 = vld [vmem:[%s3] sm:$0xff]
  %v98 = vstv %s86
  %v99 = vmax.f32 %v97, %v98
  %100 = vst [vmem:[%s3] sm:$0xff] %v99
  // Predicated region
  $region10: #{quantized_mish.1} parent=0 // pred_check
    _
  $region11: #{quantized_mish.1} parent=0 // pred_check_branch
    %102 = sbr.rel (0) target = $region13
  $region12: #{quantized_mish.1} parent=0 // pred_region
    _
  $region13: #{quantized_mish.1} parent=0 // pred_fallthru
    _
  // Predicated region
  $region14: #{quantized_mish.1} parent=0 // pred_check
    _
  $region15: #{quantized_mish.1} parent=0 // pred_check_branch
    %104 = sbr.rel (0) target = $region17
  $region16: #{quantized_mish.1} parent=0 // pred_region
    _
  $region17: #{quantized_mish.1} parent=0 // pred_fallthru
    _
  // Predicated region
  $region18: #{quantized_mish.1} parent=0 // pred_check
    _
  $region19: #{quantized_mish.1} parent=0 // pred_check_branch
    %106 = sbr.rel (0) target = $region21
  $region20: #{quantized_mish.1} parent=0 // pred_region
    _
  $region21: #{quantized_mish.1} parent=0 // pred_fallthru
    _
  // Predicated region
  $region22: #{quantized_mish.1} parent=0 // pred_check
    _
  $region23: #{quantized_mish.1} parent=0 // pred_check_branch
    %108 = sbr.rel (0) target = $region25
  $region24: #{quantized_mish.1} parent=0 // pred_region
    _
  $region25: #{quantized_mish.1} parent=0 // pred_fallthru
    _
  // Predicated region
  $region26: #{quantized_mish.1} parent=0 // pred_check
    _
  $region27: #{quantized_mish.1} parent=0 // pred_check_branch
    %110 = sbr.rel (0) target = $region29
  $region28: #{quantized_mish.1} parent=0 // pred_region
    _
  $region29: #{quantized_mish.1} parent=0 // pred_fallthru
    _
  // Predicated region
  $region30: #{quantized_mish.1} parent=0 // pred_check
    _
  $region31: #{quantized_mish.1} parent=0 // pred_check_branch
    %112 = sbr.rel (0) target = $region33
  $region32: #{quantized_mish.1} parent=0 // pred_region
    _
  $region33: #{quantized_mish.1} parent=0 // pred_fallthru
    _

// kernel: branch_0_fun.1
$region0: #{branch_0_fun.1}
  #allocation0 [shape = 'u32[]', space=smem, size = 0x4, offset = 0x4, fixed_abs, tag = 'smem constant byte address 0x4 - core index']
  #allocation1 [shape = 'u32[144,128]{1,0:T(1,128)}', space=vmem, size = 0x12000, scoped, tag = 'internal scratch']
  %s0 = inlined_call_operand.vmem [shape: f32[8,256], index: 0, kind: input, shape index: {}]
  %s1 = inlined_call_operand.vmem [shape: f32[8,128], index: 1, kind: input, shape index: {}]
  %s2 = inlined_call_operand.vmem [shape: f32[8,128], index: 2, kind: input, shape index: {}]
  %s3 = inlined_call_operand.vmem [shape: f32[8,256], index: 3, kind: output, shape index: {}]
  %s4 = sld [smem:[#allocation0]]
  $region22: #{branch_0_fun.1} parent=0
    _
  %s6 = ssub.s32 1, %s4
  %s7 = scalar_select 0, %s6, %s4
  // Predicated region
  $region2: #{branch_0_fun.1} parent=0 // pred_check
    _
  $region3: #{branch_0_fun.1} parent=0 // pred_check_branch
    %9 = sbr.rel (0) target = $region5
  $region4: #{branch_0_fun.1} parent=0 // pred_region
    _
  $region5: #{branch_0_fun.1} parent=0 // pred_fallthru
    _
  // Predicated region
  $region6: #{branch_0_fun.1} parent=0 // pred_check
    _
  $region7: #{branch_0_fun.1} parent=0 // pred_check_branch
    %11 = sbr.rel (0) target = $region9
  $region8: #{branch_0_fun.1} parent=0 // pred_region
    _
  $region9: #{branch_0_fun.1} parent=0 // pred_fallthru
    _
  // Predicated region
  $region10: #{branch_0_fun.1} parent=0 // pred_check
    _
  $region11: #{branch_0_fun.1} parent=0 // pred_check_branch
    %13 = sbr.rel (0) target = $region13
  $region12: #{branch_0_fun.1} parent=0 // pred_region
    _
  $region13: #{branch_0_fun.1} parent=0 // pred_fallthru
    _
  %v14 = vld [vmem:[%s1] sm:$0xff]
  %15 = vmin.xlane.f32.xlu0 %v14
  %v16 = vpop.xlane.xlu0 %15
  %v17 = vrot.slane %v16, 4
  %v18 = vmin.f32 %v16, %v17
  %v19 = vrot.slane %v18, 2
  %v20 = vmin.f32 %v18, %v19
  %v21 = vrot.slane %v20, 1
  %v22 = vmin.f32 %v20, %v21
  %s23 = vtos %v22
  %v24 = vld [vmem:[%s2] sm:$0xff]
  %25 = vmax.xlane.f32.xlu0 %v24
  %v26 = vpop.xlane.xlu0 %25
  %v27 = vrot.slane %v26, 4
  %v28 = vmax.f32 %v26, %v27
  %v29 = vrot.slane %v28, 2
  %v30 = vmax.f32 %v28, %v29
  %v31 = vrot.slane %v30, 1
  %v32 = vmax.f32 %v30, %v31
  %s33 = vtos %v32
  %s34 = ssub.f32 %s33, %s23
  %p35 = scmp.gt.f32.partialorder %s34, 0.0
  %v36 = vrcp.pop 255.0
  %s37 = vtos %v36
  %s38 = smul.f32 %s34, %s37
  %s39 = scalar_select %p35, %s38, 1.0
  %v40 = vstv %s39
  %v41 = vrcp.pop %v40
  %s42 = vtos %v41
  %s43 = smul.f32 %s23, %s42
  %s44 = scvt.f32.s32 %s43
  %s45 = scvt.s32.f32 %s44
  %s46 = sand.u32 2147483647, %s45
  %s47 = sand.u32 %s43, 2147483648
  %s48 = sor.u32 %s46, %s47
  %s49 = sand.u32 2147483647, %s43
  %p50 = scmp.lt.f32.partialorder %s49, 2.1474836e+09
  %s51 = scalar_select %p50, %s48, %s43
  %s52 = ssub.f32 0.0, %s51
  %v53 = vstv %s39
  %v54 = vrcp.pop %v53
  %s55 = vtos %v54
  %v56 = vld [vmem:[%s0] sm:$0xff]
  %v57 = vld [vmem:[%s0 + $0x8] sm:$0xff]
  %v58 = vstv %s55
  %v59 = vmul.f32 %v56, %v58
  %v60 = vmul.f32 %v57, %v58
  %v61 = vstv %s52
  %v62 = vadd.f32 %v59, %v61
  %v63 = vadd.f32 %v60, %v61
  %v64 = vround.ne.pseudo %v62
  %v65 = vround.ne.pseudo %v63
  %v66 = vmax.f32 %v64, 0.0
  %v67 = vmax.f32 %v65, 0.0
  %v68 = vmin.f32 %v66, 255.0
  %v69 = vmin.f32 %v67, 255.0
  %v70 = vsub.f32 %v68, %v61
  %v71 = vsub.f32 %v69, %v61
  %v72 = vstv %s39
  %v73 = vmul.f32 %v70, %v72
  %v74 = vmul.f32 %v71, %v72
  %75 = vst [vmem:[%s3] sm:$0xff] %v73
  %76 = vst [vmem:[%s3 + $0x8] sm:$0xff] %v74
  // Predicated region
  $region14: #{branch_0_fun.1} parent=0 // pred_check
    _
  $region15: #{branch_0_fun.1} parent=0 // pred_check_branch
    %78 = sbr.rel (0) target = $region17
  $region16: #{branch_0_fun.1} parent=0 // pred_region
    _
  $region17: #{branch_0_fun.1} parent=0 // pred_fallthru
    _
  // Predicated region
  $region18: #{branch_0_fun.1} parent=0 // pred_check
    _
  $region19: #{branch_0_fun.1} parent=0 // pred_check_branch
    %80 = sbr.rel (0) target = $region21
  $region20: #{branch_0_fun.1} parent=0 // pred_region
    _
  $region21: #{branch_0_fun.1} parent=0 // pred_fallthru
    _

</llo_original>
